<compile_context>
chip_gen: v7x
topology: tpu7x:2x2x1
jax: 0.10.0
libtpu: 0.0.40
codegen_flags: <defaults>
</compile_context>

<pallas_src>
import functools

import jax
import jax.numpy as jnp
from jax.experimental import pallas as pl
from jax.experimental.pallas import tpu as pltpu

EPS = 1e-5
LANE = 128
_FUSED_MAX_B = 256   # below this, use the single-shot grid-less kernel


# --------------------------------------------------------------------------
# helpers
# --------------------------------------------------------------------------
def _round_up(n, m):
    return ((n + m - 1) // m) * m


def _vmem_limit_bytes():
    """Per-generation scoped VMEM limit: ~3/4 of physical capacity capped at
    100 MiB (=> ~96 MiB on v6e/v5e, ~48 MiB on v7x's 64 MiB). Safe fallback."""
    cap = None
    try:
        cap = getattr(pltpu.get_tpu_info(), "vmem_capacity_bytes", None)
    except Exception:
        cap = None
    if not cap:
        return 32 * 1024 * 1024
    return int(min(cap * 3 // 4, 100 * 1024 * 1024))


def _mosaic_params(dims=None):
    kw = dict(vmem_limit_bytes=_vmem_limit_bytes())
    if dims is not None:
        kw["dimension_semantics"] = dims
    return pltpu.CompilerParams(**kw)


def _full_spec(a):
    ndim = a.ndim                       # bind now (avoid late-binding closure bug)
    return pl.BlockSpec(a.shape, lambda *_: (0,) * ndim)


def _const_spec(a):
    """Gridded-call spec for weights/BN params: constant block index so the
    array is DMA'd once and stays VMEM-resident across batch tiles."""
    ndim = a.ndim
    return pl.BlockSpec(a.shape, lambda i: (0,) * ndim)


# --------------------------------------------------------------------------
# kernels
# --------------------------------------------------------------------------
def _fused_kernel(x_ref, w1_ref, g1_ref, b1_ref, w2_ref, g2_ref, b2_ref,
                  wmu_ref, bmu_ref, out_ref):
    """Small-batch path: full batch resident, BN stats computed in-kernel."""

    def bn_relu(h, g, beta):
        m = jnp.mean(h, axis=0, keepdims=True)
        v = jnp.maximum(jnp.mean(h * h, axis=0, keepdims=True) - m * m, 0.0)
        scale = g * jax.lax.rsqrt(v + EPS)
        return jnp.maximum(h * scale + (beta - m * scale), 0.0)

    x = x_ref[...].astype(jnp.bfloat16)
    h = jnp.dot(x, w1_ref[...], preferred_element_type=jnp.float32)
    h = bn_relu(h, g1_ref[...], b1_ref[...])
    h = jnp.dot(h.astype(jnp.bfloat16), w2_ref[...],
                preferred_element_type=jnp.float32)
    h = bn_relu(h, g2_ref[...], b2_ref[...])
    mu = jnp.dot(h.astype(jnp.bfloat16), wmu_ref[...],
                 preferred_element_type=jnp.float32) + bmu_ref[...]
    out_ref[...] = jnp.tanh(mu).astype(out_ref.dtype)


def _accumulate_stats(s_ref, h, i, tb, true_b, need_mask):
    if need_mask:
        rid = i * tb + jax.lax.broadcasted_iota(jnp.int32, (tb, 1), 0)
        h = jnp.where(rid < true_b, h, 0.0)
    s_ref[0:1, :] += jnp.sum(h, axis=0, keepdims=True)
    s_ref[1:2, :] += jnp.sum(h * h, axis=0, keepdims=True)


def _stats1_kernel(x_ref, w1_ref, s_ref, *, tb, true_b, need_mask):
    i = pl.program_id(0)

    @pl.when(i == 0)
    def _():
        s_ref[...] = jnp.zeros_like(s_ref)

    h = jnp.dot(x_ref[...].astype(jnp.bfloat16), w1_ref[...],
                preferred_element_type=jnp.float32)
    _accumulate_stats(s_ref, h, i, tb, true_b, need_mask)


def _stats2_kernel(x_ref, w1_ref, sc1_ref, sh1_ref, w2_ref, s_ref,
                   *, tb, true_b, need_mask):
    i = pl.program_id(0)

    @pl.when(i == 0)
    def _():
        s_ref[...] = jnp.zeros_like(s_ref)

    h = jnp.dot(x_ref[...].astype(jnp.bfloat16), w1_ref[...],
                preferred_element_type=jnp.float32)
    h = jnp.maximum(h * sc1_ref[...] + sh1_ref[...], 0.0)
    h = jnp.dot(h.astype(jnp.bfloat16), w2_ref[...],
                preferred_element_type=jnp.float32)
    _accumulate_stats(s_ref, h, i, tb, true_b, need_mask)


def _final_kernel(x_ref, w1_ref, sc1_ref, sh1_ref, w2_ref, sc2_ref, sh2_ref,
                  wmu_ref, bmu_ref, out_ref):
    h = jnp.dot(x_ref[...].astype(jnp.bfloat16), w1_ref[...],
                preferred_element_type=jnp.float32)
    h = jnp.maximum(h * sc1_ref[...] + sh1_ref[...], 0.0)
    h = jnp.dot(h.astype(jnp.bfloat16), w2_ref[...],
                preferred_element_type=jnp.float32)
    h = jnp.maximum(h * sc2_ref[...] + sh2_ref[...], 0.0)
    mu = jnp.dot(h.astype(jnp.bfloat16), wmu_ref[...],
                 preferred_element_type=jnp.float32) + bmu_ref[...]
    out_ref[...] = jnp.tanh(mu).astype(out_ref.dtype)


# --------------------------------------------------------------------------
# wrapper
# --------------------------------------------------------------------------
def prepare_params(params):
    """One-time pad + cast of weights / BN params (outside the per-step call).
    Weights are stored (in_features, out_features). b1/b2 are intentionally
    dropped: training-mode BN subtracts the batch mean so they cancel."""
    input_dim, hidden_dim = params["w1"].shape
    action_dim = params["wmu"].shape[1]
    Hp = _round_up(hidden_dim, LANE)
    Ap = _round_up(action_dim, LANE)

    def pad2(a, rows, cols, fill=0.0):
        return jnp.pad(a, ((0, rows - a.shape[0]), (0, cols - a.shape[1])),
                       constant_values=fill)

    return {
        "w1": pad2(params["w1"], input_dim, Hp).astype(jnp.bfloat16),
        "w2": pad2(params["w2"], Hp, Hp).astype(jnp.bfloat16),
        "wmu": pad2(params["wmu"], Hp, Ap).astype(jnp.bfloat16),
        "g1": pad2(params["g1"], 1, Hp, 1.0).astype(jnp.float32),
        "beta1": pad2(params["beta1"], 1, Hp).astype(jnp.float32),
        "g2": pad2(params["g2"], 1, Hp, 1.0).astype(jnp.float32),
        "beta2": pad2(params["beta2"], 1, Hp).astype(jnp.float32),
        "bmu": pad2(params["bmu"], 1, Ap).astype(jnp.float32),
    }


def actor_forward(x, prep, *, action_dim, batch_tile=None):
    """x: [B, input_dim] float32.  prep: output of prepare_params."""
    B, input_dim = x.shape
    w1, w2, wmu = prep["w1"], prep["w2"], prep["wmu"]
    g1, beta1 = prep["g1"], prep["beta1"]
    g2, beta2 = prep["g2"], prep["beta2"]
    bmu = prep["bmu"]
    assert w1.shape[0] == input_dim
    Hp, Ap = w2.shape[1], wmu.shape[1]
    x = x.astype(jnp.float32)

    # ---- small batch: single fused invocation -----------------------------
    if batch_tile is None and B <= _FUSED_MAX_B:
        args = (x, w1, g1, beta1, w2, g2, beta2, wmu, bmu)
        out = pl.pallas_call(
            _fused_kernel,
            out_shape=jax.ShapeDtypeStruct((B, Ap), jnp.bfloat16),
            in_specs=[_full_spec(a) for a in args],
            out_specs=pl.BlockSpec((B, Ap), lambda *_: (0, 0)),
            compiler_params=_mosaic_params(),
        )(*args)
        return out[:, :action_dim].astype(jnp.float32)

    # ---- large batch: 3-pass batch-tiled pipeline --------------------------
    tb = batch_tile or 128
    tb = max(8, _round_up(min(tb, _round_up(B, 8)), 8))
    Bp = _round_up(B, tb)
    nbt = Bp // tb
    need_mask = Bp != B
    if need_mask:
        x = jnp.pad(x, ((0, Bp - B), (0, 0)))
    inv_b = jnp.float32(1.0 / B)

    x_spec = pl.BlockSpec((tb, input_dim), lambda i: (i, 0))
    stats_spec = pl.BlockSpec((8, Hp), lambda i: (0, 0))
    stats_shape = jax.ShapeDtypeStruct((8, Hp), jnp.float32)

    def affine(stats, gamma, beta):
        m = stats[0:1, :] * inv_b
        v = jnp.maximum(stats[1:2, :] * inv_b - m * m, 0.0)
        scale = gamma * jax.lax.rsqrt(v + EPS)
        return scale, beta - m * scale

    stats1 = pl.pallas_call(
        functools.partial(_stats1_kernel, tb=tb, true_b=B, need_mask=need_mask),
        grid=(nbt,),
        out_shape=stats_shape,
        in_specs=[x_spec, _const_spec(w1)],
        out_specs=stats_spec,
        compiler_params=_mosaic_params(("arbitrary",)),
    )(x, w1)
    sc1, sh1 = affine(stats1, g1, beta1)

    stats2 = pl.pallas_call(
        functools.partial(_stats2_kernel, tb=tb, true_b=B, need_mask=need_mask),
        grid=(nbt,),
        out_shape=stats_shape,
        in_specs=[x_spec, _const_spec(w1), _const_spec(sc1), _const_spec(sh1),
                  _const_spec(w2)],
        out_specs=stats_spec,
        compiler_params=_mosaic_params(("arbitrary",)),
    )(x, w1, sc1, sh1, w2)
    sc2, sh2 = affine(stats2, g2, beta2)

    out = pl.pallas_call(
        _final_kernel,
        grid=(nbt,),
        out_shape=jax.ShapeDtypeStruct((Bp, Ap), jnp.bfloat16),
        in_specs=[x_spec, _const_spec(w1), _const_spec(sc1), _const_spec(sh1),
                  _const_spec(w2), _const_spec(sc2), _const_spec(sh2),
                  _const_spec(wmu), _const_spec(bmu)],
        out_specs=pl.BlockSpec((tb, Ap), lambda i: (i, 0)),
        compiler_params=_mosaic_params(("parallel",)),
    )(x, w1, sc1, sh1, w2, sc2, sh2, wmu, bmu)
    return out[:B, :action_dim].astype(jnp.float32)


# --------------------------------------------------------------------------
# init + pure-JAX reference
# --------------------------------------------------------------------------
def init_params(key, input_dim, action_dim, hidden_dim):
    """PyTorch defaults: Linear W,b ~ U(-1/sqrt(fan_in), 1/sqrt(fan_in));
    BatchNorm1d gamma=1, beta=0.  Weights stored as (in, out)."""
    ks = jax.random.split(key, 6)

    def linear(kw, kb, fan_in, fan_out):
        bound = 1.0 / jnp.sqrt(fan_in)
        w = jax.random.uniform(kw, (fan_in, fan_out), jnp.float32, -bound, bound)
        b = jax.random.uniform(kb, (1, fan_out), jnp.float32, -bound, bound)
        return w, b

    w1, b1 = linear(ks[0], ks[1], input_dim, hidden_dim)
    w2, b2 = linear(ks[2], ks[3], hidden_dim, hidden_dim)
    wmu, bmu = linear(ks[4], ks[5], hidden_dim, action_dim)

    return {
        "w1": w1, "b1": b1,
        "g1": jnp.ones((1, hidden_dim), jnp.float32),
        "beta1": jnp.zeros((1, hidden_dim), jnp.float32),
        "w2": w2, "b2": b2,
        "g2": jnp.ones((1, hidden_dim), jnp.float32),
        "beta2": jnp.zeros((1, hidden_dim), jnp.float32),
        "wmu": wmu, "bmu": bmu,
    }


def actor_ref(x, p):
    """Pure-JAX reference mirroring the kernel's bf16-matmul / f32-elementwise
    precision (includes b1/b2 to show the bias fold is exact)."""
    def bn(h, g, b):
        m = jnp.mean(h, axis=0, keepdims=True)
        v = jnp.mean((h - m) ** 2, axis=0, keepdims=True)
        return (h - m) * jax.lax.rsqrt(v + EPS) * g + b

    bf = jnp.bfloat16
    h = jnp.dot(x.astype(bf), p["w1"].astype(bf),
                preferred_element_type=jnp.float32) + p["b1"]
    h = jnp.maximum(bn(h, p["g1"], p["beta1"]), 0.0)
    h = jnp.dot(h.astype(bf), p["w2"].astype(bf),
                preferred_element_type=jnp.float32) + p["b2"]
    h = jnp.maximum(bn(h, p["g2"], p["beta2"]), 0.0)
    mu = jnp.dot(h.astype(bf), p["wmu"].astype(bf),
                 preferred_element_type=jnp.float32) + p["bmu"]
    return jnp.tanh(mu)


# --------------------------------------------------------------------------
# main
# --------------------------------------------------------------------------
if __name__ == "__main__":
    key = jax.random.PRNGKey(0)
    kx, kp, kx2 = jax.random.split(key, 3)

    # Small shape consistent with the module (default hidden_dim=128).
    B, input_dim, action_dim, hidden_dim = 8, 16, 4, 128
    params = init_params(kp, input_dim, action_dim, hidden_dim)
    prep = prepare_params(params)   # padded/cast once, reused every step

    fwd = jax.jit(actor_forward, static_argnames=("action_dim", "batch_tile"))

    # --- path 1: fused single-shot kernel (latency-bound toy batch) ---------
    x = jax.random.normal(kx, (B, input_dim), jnp.float32)
    out = jax.block_until_ready(fwd(x, prep, action_dim=action_dim))
    ref = actor_ref(x, params)
    assert out.shape == (B, action_dim)
    assert jnp.allclose(out, ref, atol=4e-3, rtol=4e-3), "fused path mismatch"

    # --- path 2: batch-tiled 3-pass pipeline (non-multiple B tests masking) -
    B2 = 500
    x2 = jax.random.normal(kx2, (B2, input_dim), jnp.float32)
    out2 = jax.block_until_ready(
        fwd(x2, prep, action_dim=action_dim, batch_tile=128))
    ref2 = actor_ref(x2, params)
    assert out2.shape == (B2, action_dim)
    assert jnp.allclose(out2, ref2, atol=4e-3, rtol=4e-3), "tiled path mismatch"

    print("KERNEL_OK")
</pallas_src>

<mosaic_0001>
module attributes {stable_mosaic.version = 11 : i64} {
  func.func @_fused_kernel(%arg0: memref<8x16xf32, #tpu.memory_space<vmem>>, %arg1: memref<16x128xbf16, #tpu.memory_space<vmem>>, %arg2: memref<1x128xf32, #tpu.memory_space<vmem>>, %arg3: memref<1x128xf32, #tpu.memory_space<vmem>>, %arg4: memref<128x128xbf16, #tpu.memory_space<vmem>>, %arg5: memref<1x128xf32, #tpu.memory_space<vmem>>, %arg6: memref<1x128xf32, #tpu.memory_space<vmem>>, %arg7: memref<128x128xbf16, #tpu.memory_space<vmem>>, %arg8: memref<1x128xf32, #tpu.memory_space<vmem>>, %arg9: memref<8x128xbf16, #tpu.memory_space<vmem>>) attributes {dimension_semantics = [], scalar_prefetch = 0 : i64, scratch_operands = 0 : i64, tpu.core_type = #tpu.core_type<tc>} {
    %c0 = arith.constant 0 : index
    %c0_0 = arith.constant 0 : index
    %0 = vector.load %arg0[%c0, %c0_0] : memref<8x16xf32, #tpu.memory_space<vmem>>, vector<8x16xf32>
    %1 = arith.truncf %0 : vector<8x16xf32> to vector<8x16xbf16>
    %c0_1 = arith.constant 0 : index
    %c0_2 = arith.constant 0 : index
    %2 = vector.load %arg1[%c0_1, %c0_2] : memref<16x128xbf16, #tpu.memory_space<vmem>>, vector<16x128xbf16>
    %cst = arith.constant dense<0.000000e+00> : vector<8x128xf32>
    %3 = tpu.matmul %1, %2, %cst {dimension_numbers = #tpu.dot_dimension_numbers<[1], [0], [0], [1], [0, 0, 1, 1], [], []>} : vector<8x16xbf16>, vector<16x128xbf16>, vector<8x128xf32> -> vector<8x128xf32>
    %c0_3 = arith.constant 0 : index
    %c0_4 = arith.constant 0 : index
    %4 = vector.load %arg2[%c0_3, %c0_4] : memref<1x128xf32, #tpu.memory_space<vmem>>, vector<1x128xf32>
    %c0_5 = arith.constant 0 : index
    %c0_6 = arith.constant 0 : index
    %5 = vector.load %arg3[%c0_5, %c0_6] : memref<1x128xf32, #tpu.memory_space<vmem>>, vector<1x128xf32>
    %cst_7 = arith.constant dense<0.000000e+00> : vector<128xf32>
    %6 = vector.multi_reduction <add>, %3, %cst_7 [0] : vector<8x128xf32> to vector<128xf32>
    %7 = vector.shape_cast %6 : vector<128xf32> to vector<1x128xf32>
    %cst_8 = arith.constant 8.000000e+00 : f32
    %8 = vector.broadcast %cst_8 : f32 to vector<1x128xf32>
    %9 = arith.divf %7, %8 : vector<1x128xf32>
    %10 = arith.mulf %3, %3 : vector<8x128xf32>
    %cst_9 = arith.constant dense<0.000000e+00> : vector<128xf32>
    %11 = vector.multi_reduction <add>, %10, %cst_9 [0] : vector<8x128xf32> to vector<128xf32>
    %12 = vector.shape_cast %11 : vector<128xf32> to vector<1x128xf32>
    %cst_10 = arith.constant 8.000000e+00 : f32
    %13 = vector.broadcast %cst_10 : f32 to vector<1x128xf32>
    %14 = arith.divf %12, %13 : vector<1x128xf32>
    %15 = arith.mulf %9, %9 : vector<1x128xf32>
    %16 = arith.subf %14, %15 : vector<1x128xf32>
    %cst_11 = arith.constant 0.000000e+00 : f32
    %17 = vector.broadcast %cst_11 : f32 to vector<1x128xf32>
    %18 = arith.maximumf %16, %17 : vector<1x128xf32>
    %cst_12 = arith.constant 9.99999974E-6 : f32
    %19 = vector.broadcast %cst_12 : f32 to vector<1x128xf32>
    %20 = arith.addf %18, %19 : vector<1x128xf32>
    %21 = math.rsqrt %20 : vector<1x128xf32>
    %22 = arith.mulf %4, %21 : vector<1x128xf32>
    %23 = vector.broadcast %22 : vector<1x128xf32> to vector<8x128xf32>
    %24 = arith.mulf %3, %23 : vector<8x128xf32>
    %25 = arith.mulf %9, %22 : vector<1x128xf32>
    %26 = arith.subf %5, %25 : vector<1x128xf32>
    %27 = vector.broadcast %26 : vector<1x128xf32> to vector<8x128xf32>
    %28 = arith.addf %24, %27 : vector<8x128xf32>
    %cst_13 = arith.constant 0.000000e+00 : f32
    %29 = vector.broadcast %cst_13 : f32 to vector<8x128xf32>
    %30 = arith.maximumf %28, %29 : vector<8x128xf32>
    %31 = arith.truncf %30 : vector<8x128xf32> to vector<8x128xbf16>
    %c0_14 = arith.constant 0 : index
    %c0_15 = arith.constant 0 : index
    %32 = vector.load %arg4[%c0_14, %c0_15] : memref<128x128xbf16, #tpu.memory_space<vmem>>, vector<128x128xbf16>
    %cst_16 = arith.constant dense<0.000000e+00> : vector<8x128xf32>
    %33 = tpu.matmul %31, %32, %cst_16 {dimension_numbers = #tpu.dot_dimension_numbers<[1], [0], [0], [1], [0, 0, 1, 1], [], []>} : vector<8x128xbf16>, vector<128x128xbf16>, vector<8x128xf32> -> vector<8x128xf32>
    %c0_17 = arith.constant 0 : index
    %c0_18 = arith.constant 0 : index
    %34 = vector.load %arg5[%c0_17, %c0_18] : memref<1x128xf32, #tpu.memory_space<vmem>>, vector<1x128xf32>
    %c0_19 = arith.constant 0 : index
    %c0_20 = arith.constant 0 : index
    %35 = vector.load %arg6[%c0_19, %c0_20] : memref<1x128xf32, #tpu.memory_space<vmem>>, vector<1x128xf32>
    %cst_21 = arith.constant dense<0.000000e+00> : vector<128xf32>
    %36 = vector.multi_reduction <add>, %33, %cst_21 [0] : vector<8x128xf32> to vector<128xf32>
    %37 = vector.shape_cast %36 : vector<128xf32> to vector<1x128xf32>
    %cst_22 = arith.constant 8.000000e+00 : f32
    %38 = vector.broadcast %cst_22 : f32 to vector<1x128xf32>
    %39 = arith.divf %37, %38 : vector<1x128xf32>
    %40 = arith.mulf %33, %33 : vector<8x128xf32>
    %cst_23 = arith.constant dense<0.000000e+00> : vector<128xf32>
    %41 = vector.multi_reduction <add>, %40, %cst_23 [0] : vector<8x128xf32> to vector<128xf32>
    %42 = vector.shape_cast %41 : vector<128xf32> to vector<1x128xf32>
    %cst_24 = arith.constant 8.000000e+00 : f32
    %43 = vector.broadcast %cst_24 : f32 to vector<1x128xf32>
    %44 = arith.divf %42, %43 : vector<1x128xf32>
    %45 = arith.mulf %39, %39 : vector<1x128xf32>
    %46 = arith.subf %44, %45 : vector<1x128xf32>
    %cst_25 = arith.constant 0.000000e+00 : f32
    %47 = vector.broadcast %cst_25 : f32 to vector<1x128xf32>
    %48 = arith.maximumf %46, %47 : vector<1x128xf32>
    %cst_26 = arith.constant 9.99999974E-6 : f32
    %49 = vector.broadcast %cst_26 : f32 to vector<1x128xf32>
    %50 = arith.addf %48, %49 : vector<1x128xf32>
    %51 = math.rsqrt %50 : vector<1x128xf32>
    %52 = arith.mulf %34, %51 : vector<1x128xf32>
    %53 = vector.broadcast %52 : vector<1x128xf32> to vector<8x128xf32>
    %54 = arith.mulf %33, %53 : vector<8x128xf32>
    %55 = arith.mulf %39, %52 : vector<1x128xf32>
    %56 = arith.subf %35, %55 : vector<1x128xf32>
    %57 = vector.broadcast %56 : vector<1x128xf32> to vector<8x128xf32>
    %58 = arith.addf %54, %57 : vector<8x128xf32>
    %cst_27 = arith.constant 0.000000e+00 : f32
    %59 = vector.broadcast %cst_27 : f32 to vector<8x128xf32>
    %60 = arith.maximumf %58, %59 : vector<8x128xf32>
    %61 = arith.truncf %60 : vector<8x128xf32> to vector<8x128xbf16>
    %c0_28 = arith.constant 0 : index
    %c0_29 = arith.constant 0 : index
    %62 = vector.load %arg7[%c0_28, %c0_29] : memref<128x128xbf16, #tpu.memory_space<vmem>>, vector<128x128xbf16>
    %cst_30 = arith.constant dense<0.000000e+00> : vector<8x128xf32>
    %63 = tpu.matmul %61, %62, %cst_30 {dimension_numbers = #tpu.dot_dimension_numbers<[1], [0], [0], [1], [0, 0, 1, 1], [], []>} : vector<8x128xbf16>, vector<128x128xbf16>, vector<8x128xf32> -> vector<8x128xf32>
    %c0_31 = arith.constant 0 : index
    %c0_32 = arith.constant 0 : index
    %64 = vector.load %arg8[%c0_31, %c0_32] : memref<1x128xf32, #tpu.memory_space<vmem>>, vector<1x128xf32>
    %65 = vector.broadcast %64 : vector<1x128xf32> to vector<8x128xf32>
    %66 = arith.addf %63, %65 : vector<8x128xf32>
    %67 = math.tanh %66 : vector<8x128xf32>
    %68 = arith.truncf %67 : vector<8x128xf32> to vector<8x128xbf16>
    %c0_33 = arith.constant 0 : index
    %c0_34 = arith.constant 0 : index
    %69 = vector.load %arg9[%c0_33, %c0_34] : memref<8x128xbf16, #tpu.memory_space<vmem>>, vector<8x128xbf16>
    tpu.vector_store %arg9[%c0_33, %c0_34], %68 {strides = array<i32>} : memref<8x128xbf16, #tpu.memory_space<vmem>>, vector<8x128xbf16>,
    return
  }
}

</mosaic_0001>

<llo_original>
// kernel: actor_forward.1
$region0: #{actor_forward.1}
  #allocation0 [shape = 'u32[]', space=smem, size = 0x4, offset = 0x4, fixed_abs, tag = 'smem constant byte address 0x4 - core index']
  #allocation1 [shape = 'u32[144,128]{1,0:T(1,128)}', space=vmem, size = 0x12000, scoped, tag = 'internal scratch']
  %s0 = inlined_call_operand.hbm [shape: f32[8,16], index: 0, kind: input, shape index: {}]
  %s1 = inlined_call_operand.vmem [shape: bf16[16,128], index: 1, kind: input, shape index: {}]
  %s2 = inlined_call_operand.vmem [shape: f32[1,128], index: 2, kind: input, shape index: {}]
  %s3 = inlined_call_operand.vmem [shape: f32[1,128], index: 3, kind: input, shape index: {}]
  %s4 = inlined_call_operand.hbm [shape: bf16[128,128], index: 4, kind: input, shape index: {}]
  %s5 = inlined_call_operand.vmem [shape: f32[1,128], index: 5, kind: input, shape index: {}]
  %s6 = inlined_call_operand.vmem [shape: f32[1,128], index: 6, kind: input, shape index: {}]
  %s7 = inlined_call_operand.hbm [shape: bf16[128,128], index: 7, kind: input, shape index: {}]
  %s8 = inlined_call_operand.vmem [shape: f32[1,128], index: 8, kind: input, shape index: {}]
  %s9 = inlined_call_operand.vmem [shape: bf16[8,128], index: 9, kind: output, shape index: {}]
  %s10 = sld [smem:[#allocation0]]
  $region58: #{actor_forward.1} parent=0
    _
  %s12 = ssub.s32 1, %s10
  %s13 = scalar_select 0, %s12, %s10
  $region1: #{actor_forward.1} parent=0
    #allocation2 [shape = 'u8[4096]{0}', space=vmem, size = 0x1000, scoped, tag = 'input window, operand 0, single buffered']
    #allocation3 [shape = 's32[1]{0}', space=sflag, size = 0x4, scoped, tag = 'scoped memory for actor_forward.1']
    #allocation4 [shape = 'u8[32768]{0}', space=vmem, size = 0x8000, scoped, tag = 'input window, operand 4, single buffered']
    #allocation5 [shape = 's32[1]{0}', space=sflag, size = 0x4, scoped, tag = 'scoped memory for actor_forward.1']
    #allocation6 [shape = 'u8[32768]{0}', space=vmem, size = 0x8000, scoped, tag = 'input window, operand 7, single buffered']
    %14 = vsyncpa [#allocation3], 0
    %15 = vsyncpa [#allocation5], 0
    // Predicated region
    $region2: #{actor_forward.1} parent=1 // pred_check
      _
    $region3: #{actor_forward.1} parent=1 // pred_check_branch
      %17 = sbr.rel (0) target = $region5
    $region4: #{actor_forward.1} parent=1 // pred_region
      %s19 = ssub.s32 128, 128
      %20 = vsyncadd [#allocation3], %s19
      %s22 = sshll.u32 [#allocation2], 4
      %s23 = int_to_ptr.vmem [resolvable:$true] %s22
      %25 = dma.hbm_to_vmem [thread:$0]  %s0, 128, %s23, [#allocation3]
    $region5: #{actor_forward.1} parent=1 // pred_fallthru
      _
    // Predicated region
    $region6: #{actor_forward.1} parent=1 // pred_check
      _
    $region7: #{actor_forward.1} parent=1 // pred_check_branch
      %27 = sbr.rel (0) target = $region9
    $region8: #{actor_forward.1} parent=1 // pred_region
      _
    $region9: #{actor_forward.1} parent=1 // pred_fallthru
      _
    // Predicated region
    $region10: #{actor_forward.1} parent=1 // pred_check
      _
    $region11: #{actor_forward.1} parent=1 // pred_check_branch
      %29 = sbr.rel (0) target = $region13
    $region12: #{actor_forward.1} parent=1 // pred_region
      _
    $region13: #{actor_forward.1} parent=1 // pred_fallthru
      _
    // Predicated region
    $region14: #{actor_forward.1} parent=1 // pred_check
      _
    $region15: #{actor_forward.1} parent=1 // pred_check_branch
      %31 = sbr.rel (0) target = $region17
    $region16: #{actor_forward.1} parent=1 // pred_region
      _
    $region17: #{actor_forward.1} parent=1 // pred_fallthru
      _
    // Predicated region
    $region18: #{actor_forward.1} parent=1 // pred_check
      _
    $region19: #{actor_forward.1} parent=1 // pred_check_branch
      %33 = sbr.rel (0) target = $region21
    $region20: #{actor_forward.1} parent=1 // pred_region
      %s35 = ssub.s32 1024, 1024
      %36 = vsyncadd [#allocation5], %s35
      %s37 = sshll.u32 [#allocation4], 4
      %s38 = int_to_ptr.vmem [resolvable:$true] %s37
      %43 = dma.hbm_to_vmem [thread:$0]  %s4, 1024, %s38, [#allocation5], 64, 64, 4
    $region21: #{actor_forward.1} parent=1 // pred_fallthru
      _
    // Predicated region
    $region22: #{actor_forward.1} parent=1 // pred_check
      _
    $region23: #{actor_forward.1} parent=1 // pred_check_branch
      %45 = sbr.rel (0) target = $region25
    $region24: #{actor_forward.1} parent=1 // pred_region
      _
    $region25: #{actor_forward.1} parent=1 // pred_fallthru
      _
    // Predicated region
    $region26: #{actor_forward.1} parent=1 // pred_check
      _
    $region27: #{actor_forward.1} parent=1 // pred_check_branch
      %47 = sbr.rel (0) target = $region29
    $region28: #{actor_forward.1} parent=1 // pred_region
      _
    $region29: #{actor_forward.1} parent=1 // pred_fallthru
      _
    // Predicated region
    $region30: #{actor_forward.1} parent=1 // pred_check
      _
    $region31: #{actor_forward.1} parent=1 // pred_check_branch
      %49 = sbr.rel (0) target = $region33
    $region32: #{actor_forward.1} parent=1 // pred_region
      %s51 = ssub.s32 1024, 1024
      %52 = vsyncadd [#allocation5], %s51
      %s53 = sshll.u32 [#allocation6], 4
      %s54 = int_to_ptr.vmem [resolvable:$true] %s53
      %59 = dma.hbm_to_vmem [thread:$0]  %s7, 1024, %s54, [#allocation5], 64, 64, 4
    $region33: #{actor_forward.1} parent=1 // pred_fallthru
      _
    // Predicated region
    $region34: #{actor_forward.1} parent=1 // pred_check
      _
    $region35: #{actor_forward.1} parent=1 // pred_check_branch
      %61 = sbr.rel (0) target = $region37
    $region36: #{actor_forward.1} parent=1 // pred_region
      _
    $region37: #{actor_forward.1} parent=1 // pred_fallthru
      _
    // Predicated region
    $region38: #{actor_forward.1} parent=1 // pred_check
      _
    $region39: #{actor_forward.1} parent=1 // pred_check_branch
      %63 = sbr.rel (0) target = $region41
    $region40: #{actor_forward.1} parent=1 // pred_region
      %64 = dma.done [#allocation3], 128
    $region41: #{actor_forward.1} parent=1 // pred_fallthru
      _
    // Predicated region
    $region42: #{actor_forward.1} parent=1 // pred_check
      _
    $region43: #{actor_forward.1} parent=1 // pred_check_branch
      %66 = sbr.rel (0) target = $region45
    $region44: #{actor_forward.1} parent=1 // pred_region
      %67 = dma.done [#allocation5], 1024
    $region45: #{actor_forward.1} parent=1 // pred_fallthru
      _
    // Predicated region
    $region46: #{actor_forward.1} parent=1 // pred_check
      _
    $region47: #{actor_forward.1} parent=1 // pred_check_branch
      %69 = sbr.rel (0) target = $region49
    $region48: #{actor_forward.1} parent=1 // pred_region
      %70 = dma.done [#allocation5], 1024
    $region49: #{actor_forward.1} parent=1 // pred_fallthru
      _
    %v72 = vld [vmem:[#allocation2] sm:$0xff]
    %v73 = vpack.c.bf16 %v72, %v72
    %v74 = vld [vmem:[%s1] sm:$0xf]
    %v75 = vld [vmem:[%s1 + $0x4] sm:$0xf]
    %v78 = vunpack.c.l.b16 %v74
    %v79 = vunpack.c.l.b16 %v75
    %v80 = vpack.c.b16 %v79, %v78
    %vm82 = vcmask 130048
    %v84 = vsel %vm82, %v73, 0
    %86 = vmatprep.subr.bf16.mxu0 0
    %87 = vmatpush1.bf16.msra.mxu0 %v80
    %88 = vmatprep.subr.bf16.mxu0 0
    %89 = vmatpush1.bf16.msra.mxu0 0
    %90 = vmatprep.subr.bf16.mxu0 0
    %91 = vmatpush1.bf16.msra.mxu0 0
    %92 = vmatprep.subr.bf16.mxu0 0
    %93 = vmatpush1.bf16.msra.mxu0 0
    %94 = vmatprep.subr.bf16.mxu0 0
    %95 = vmatpush1.bf16.msra.mxu0 0
    %96 = vmatprep.subr.bf16.mxu0 0
    %97 = vmatpush1.bf16.msra.mxu0 0
    %98 = vmatprep.subr.bf16.mxu0 0
    %99 = vmatpush1.bf16.msra.mxu0 0
    %100 = vmatprep.subr.bf16.mxu0 0
    %101 = vmatpush1.bf16.msra.mxu0 0
    %102 = vmatprep.subr.bf16.mxu0 0
    %103 = vmatpush1.bf16.msra.mxu0 0
    %104 = vmatprep.subr.bf16.mxu0 0
    %105 = vmatpush1.bf16.msra.mxu0 0
    %106 = vmatprep.subr.bf16.mxu0 0
    %107 = vmatpush1.bf16.msra.mxu0 0
    %108 = vmatprep.subr.bf16.mxu0 0
    %109 = vmatpush1.bf16.msra.mxu0 0
    %110 = vmatprep.subr.bf16.mxu0 0
    %111 = vmatpush1.bf16.msra.mxu0 0
    %112 = vmatprep.subr.bf16.mxu0 0
    %113 = vmatpush1.bf16.msra.mxu0 0
    %114 = vmatprep.subr.bf16.mxu0 0
    %115 = vmatpush1.bf16.msra.mxu0 0
    %116 = vmatprep.subr.bf16.mxu0 0
    %117 = vmatpush1.bf16.msra.mxu0 0
    %118 = vmatprep.mubr.bf16.mxu0 0
    %119 = vmatmul.mubr.bf16.gmra.mrb[0].mxu0 %v84
    %v120 = vpop.f32.mrb[0].mxu0
    %v121 = vadd.f32 0.0, %v120
    %v122 = vpop.f32.mrb[0].mxu0
    %v123 = vpop.f32.mrb[0].mxu0
    %v124 = vpop.f32.mrb[0].mxu0
    %125 = vdwg.mxu0
    %v126 = vld [vmem:[%s2] sm:$0x1]
    %v127 = vld [vmem:[%s3] sm:$0x1]
    %v128 = vrot.slane %v121, 4
    %v129 = vadd.f32 %v121, %v128
    %v130 = vrot.slane %v129, 2
    %v131 = vadd.f32 %v129, %v130
    %v132 = vrot.slane %v131, 1
    %v133 = vadd.f32 %v131, %v132
    %v134 = vrcp.pop 8.0
    %v135 = vmul.f32 %v133, %v134
    %v136 = vmul.f32 %v121, %v121
    %v137 = vrot.slane %v136, 4
    %v138 = vadd.f32 %v136, %v137
    %v139 = vrot.slane %v138, 2
    %v140 = vadd.f32 %v138, %v139
    %v141 = vrot.slane %v140, 1
    %v142 = vadd.f32 %v140, %v141
    %v143 = vmul.f32 %v142, %v134
    %v144 = vmul.f32 %v135, %v135
    %v145 = vsub.f32 %v143, %v144
    %v146 = vmax.f32 %v145, 0.0
    %v147 = vadd.f32 %v146, 1e-05
    %v148 = vrsqrt.pop %v147
    %v149 = vmul.f32 %v126, %v148
    %v151 = vlaneseq
    %v152 = vshrl.u32 %v151, 7
    %v153 = vsub.s32 0, %v152
    %v154 = vrot.slane %v149, %v153
    %v156 = vmul.f32 %v121, %v154
    %v157 = vmul.f32 %v135, %v149
    %v158 = vsub.f32 %v127, %v157
    %v160 = vlaneseq
    %v161 = vshrl.u32 %v160, 7
    %v162 = vsub.s32 0, %v161
    %v163 = vrot.slane %v158, %v162
    %v165 = vadd.f32 %v156, %v163
    %v166 = vmax.f32 %v165, 0.0
    %v167 = vpack.c.bf16 %v166, %v166
    %v168 = vld [vmem:[#allocation4] sm:$0xf]
    %v169 = vld [vmem:[#allocation4 + $0x4] sm:$0xf]
    %v170 = vld [vmem:[#allocation4 + $0x8] sm:$0xf]
    %v171 = vld [vmem:[#allocation4 + $0xc] sm:$0xf]
    %v172 = vld [vmem:[#allocation4 + $0x10] sm:$0xf]
    %v173 = vld [vmem:[#allocation4 + $0x14] sm:$0xf]
    %v174 = vld [vmem:[#allocation4 + $0x18] sm:$0xf]
    %v175 = vld [vmem:[#allocation4 + $0x1c] sm:$0xf]
    %v176 = vld [vmem:[#allocation4 + $0x20] sm:$0xf]
    %v177 = vld [vmem:[#allocation4 + $0x24] sm:$0xf]
    %v178 = vld [vmem:[#allocation4 + $0x28] sm:$0xf]
    %v179 = vld [vmem:[#allocation4 + $0x2c] sm:$0xf]
    %v180 = vld [vmem:[#allocation4 + $0x30] sm:$0xf]
    %v181 = vld [vmem:[#allocation4 + $0x34] sm:$0xf]
    %v182 = vld [vmem:[#allocation4 + $0x38] sm:$0xf]
    %v183 = vld [vmem:[#allocation4 + $0x3c] sm:$0xf]
    %v200 = vunpack.c.l.b16 %v168
    %v201 = vunpack.c.l.b16 %v169
    %v202 = vunpack.c.l.b16 %v170
    %v203 = vunpack.c.l.b16 %v171
    %v204 = vunpack.c.l.b16 %v172
    %v205 = vunpack.c.l.b16 %v173
    %v206 = vunpack.c.l.b16 %v174
    %v207 = vunpack.c.l.b16 %v175
    %v208 = vunpack.c.l.b16 %v176
    %v209 = vunpack.c.l.b16 %v177
    %v210 = vunpack.c.l.b16 %v178
    %v211 = vunpack.c.l.b16 %v179
    %v212 = vunpack.c.l.b16 %v180
    %v213 = vunpack.c.l.b16 %v181
    %v214 = vunpack.c.l.b16 %v182
    %v215 = vunpack.c.l.b16 %v183
    %v216 = vpack.c.b16 %v201, %v200
    %v217 = vpack.c.b16 %v203, %v202
    %v218 = vpack.c.b16 %v205, %v204
    %v219 = vpack.c.b16 %v207, %v206
    %v220 = vpack.c.b16 %v209, %v208
    %v221 = vpack.c.b16 %v211, %v210
    %v222 = vpack.c.b16 %v213, %v212
    %v223 = vpack.c.b16 %v215, %v214
    %232 = vmatprep.subr.bf16.mxu0 0
    %233 = vmatpush1.bf16.msra.mxu0 %v216
    %234 = vmatprep.subr.bf16.mxu0 0
    %235 = vmatpush1.bf16.msra.mxu0 %v217
    %236 = vmatprep.subr.bf16.mxu0 0
    %237 = vmatpush1.bf16.msra.mxu0 %v218
    %238 = vmatprep.subr.bf16.mxu0 0
    %239 = vmatpush1.bf16.msra.mxu0 %v219
    %240 = vmatprep.subr.bf16.mxu0 0
    %241 = vmatpush1.bf16.msra.mxu0 %v220
    %242 = vmatprep.subr.bf16.mxu0 0
    %243 = vmatpush1.bf16.msra.mxu0 %v221
    %244 = vmatprep.subr.bf16.mxu0 0
    %245 = vmatpush1.bf16.msra.mxu0 %v222
    %246 = vmatprep.subr.bf16.mxu0 0
    %247 = vmatpush1.bf16.msra.mxu0 %v223
    %248 = vmatprep.subr.bf16.mxu0 0
    %249 = vmatpush1.bf16.msra.mxu0 0
    %250 = vmatprep.subr.bf16.mxu0 0
    %251 = vmatpush1.bf16.msra.mxu0 0
    %252 = vmatprep.subr.bf16.mxu0 0
    %253 = vmatpush1.bf16.msra.mxu0 0
    %254 = vmatprep.subr.bf16.mxu0 0
    %255 = vmatpush1.bf16.msra.mxu0 0
    %256 = vmatprep.subr.bf16.mxu0 0
    %257 = vmatpush1.bf16.msra.mxu0 0
    %258 = vmatprep.subr.bf16.mxu0 0
    %259 = vmatpush1.bf16.msra.mxu0 0
    %260 = vmatprep.subr.bf16.mxu0 0
    %261 = vmatpush1.bf16.msra.mxu0 0
    %262 = vmatprep.subr.bf16.mxu0 0
    %263 = vmatpush1.bf16.msra.mxu0 0
    %264 = vmatprep.mubr.bf16.mxu0 0
    %265 = vmatmul.mubr.bf16.gmra.mrb[0].mxu0 %v167
    %v266 = vpop.f32.mrb[0].mxu0
    %v267 = vadd.f32 0.0, %v266
    %v268 = vpop.f32.mrb[0].mxu0
    %v269 = vpop.f32.mrb[0].mxu0
    %v270 = vpop.f32.mrb[0].mxu0
    %271 = vdwg.mxu0
    %v272 = vld [vmem:[%s5] sm:$0x1]
    %v273 = vld [vmem:[%s6] sm:$0x1]
    %v274 = vrot.slane %v267, 4
    %v275 = vadd.f32 %v267, %v274
    %v276 = vrot.slane %v275, 2
    %v277 = vadd.f32 %v275, %v276
    %v278 = vrot.slane %v277, 1
    %v279 = vadd.f32 %v277, %v278
    %v280 = vmul.f32 %v279, %v134
    %v281 = vmul.f32 %v267, %v267
    %v282 = vrot.slane %v281, 4
    %v283 = vadd.f32 %v281, %v282
    %v284 = vrot.slane %v283, 2
    %v285 = vadd.f32 %v283, %v284
    %v286 = vrot.slane %v285, 1
    %v287 = vadd.f32 %v285, %v286
    %v288 = vmul.f32 %v287, %v134
    %v289 = vmul.f32 %v280, %v280
    %v290 = vsub.f32 %v288, %v289
    %v291 = vmax.f32 %v290, 0.0
    %v292 = vadd.f32 %v291, 1e-05
    %v293 = vrsqrt.pop %v292
    %v294 = vmul.f32 %v272, %v293
    %v296 = vlaneseq
    %v297 = vshrl.u32 %v296, 7
    %v298 = vsub.s32 0, %v297
    %v299 = vrot.slane %v294, %v298
    %v301 = vmul.f32 %v267, %v299
    %v302 = vmul.f32 %v280, %v294
    %v303 = vsub.f32 %v273, %v302
    %v305 = vlaneseq
    %v306 = vshrl.u32 %v305, 7
    %v307 = vsub.s32 0, %v306
    %v308 = vrot.slane %v303, %v307
    %v310 = vadd.f32 %v301, %v308
    %v311 = vmax.f32 %v310, 0.0
    %v312 = vpack.c.bf16 %v311, %v311
    %v313 = vld [vmem:[#allocation6] sm:$0xf]
    %v314 = vld [vmem:[#allocation6 + $0x4] sm:$0xf]
    %v315 = vld [vmem:[#allocation6 + $0x8] sm:$0xf]
    %v316 = vld [vmem:[#allocation6 + $0xc] sm:$0xf]
    %v317 = vld [vmem:[#allocation6 + $0x10] sm:$0xf]
    %v318 = vld [vmem:[#allocation6 + $0x14] sm:$0xf]
    %v319 = vld [vmem:[#allocation6 + $0x18] sm:$0xf]
    %v320 = vld [vmem:[#allocation6 + $0x1c] sm:$0xf]
    %v321 = vld [vmem:[#allocation6 + $0x20] sm:$0xf]
    %v322 = vld [vmem:[#allocation6 + $0x24] sm:$0xf]
    %v323 = vld [vmem:[#allocation6 + $0x28] sm:$0xf]
    %v324 = vld [vmem:[#allocation6 + $0x2c] sm:$0xf]
    %v325 = vld [vmem:[#allocation6 + $0x30] sm:$0xf]
    %v326 = vld [vmem:[#allocation6 + $0x34] sm:$0xf]
    %v327 = vld [vmem:[#allocation6 + $0x38] sm:$0xf]
    %v328 = vld [vmem:[#allocation6 + $0x3c] sm:$0xf]
    %v329 = vld [vmem:[%s8] sm:$0x1]
    %v331 = vlaneseq
    %v332 = vshrl.u32 %v331, 7
    %v333 = vsub.s32 0, %v332
    %v334 = vrot.slane %v329, %v333
    %v352 = vunpack.c.l.b16 %v313
    %v353 = vunpack.c.l.b16 %v314
    %v354 = vunpack.c.l.b16 %v315
    %v355 = vunpack.c.l.b16 %v316
    %v356 = vunpack.c.l.b16 %v317
    %v357 = vunpack.c.l.b16 %v318
    %v358 = vunpack.c.l.b16 %v319
    %v359 = vunpack.c.l.b16 %v320
    %v360 = vunpack.c.l.b16 %v321
    %v361 = vunpack.c.l.b16 %v322
    %v362 = vunpack.c.l.b16 %v323
    %v363 = vunpack.c.l.b16 %v324
    %v364 = vunpack.c.l.b16 %v325
    %v365 = vunpack.c.l.b16 %v326
    %v366 = vunpack.c.l.b16 %v327
    %v367 = vunpack.c.l.b16 %v328
    %v368 = vpack.c.b16 %v353, %v352
    %v369 = vpack.c.b16 %v355, %v354
    %v370 = vpack.c.b16 %v357, %v356
    %v371 = vpack.c.b16 %v359, %v358
    %v372 = vpack.c.b16 %v361, %v360
    %v373 = vpack.c.b16 %v363, %v362
    %v374 = vpack.c.b16 %v365, %v364
    %v375 = vpack.c.b16 %v367, %v366
    %384 = vmatprep.subr.bf16.mxu0 0
    %385 = vmatpush1.bf16.msra.mxu0 %v368
    %386 = vmatprep.subr.bf16.mxu0 0
    %387 = vmatpush1.bf16.msra.mxu0 %v369
    %388 = vmatprep.subr.bf16.mxu0 0
    %389 = vmatpush1.bf16.msra.mxu0 %v370
    %390 = vmatprep.subr.bf16.mxu0 0
    %391 = vmatpush1.bf16.msra.mxu0 %v371
    %392 = vmatprep.subr.bf16.mxu0 0
    %393 = vmatpush1.bf16.msra.mxu0 %v372
    %394 = vmatprep.subr.bf16.mxu0 0
    %395 = vmatpush1.bf16.msra.mxu0 %v373
    %396 = vmatprep.subr.bf16.mxu0 0
    %397 = vmatpush1.bf16.msra.mxu0 %v374
    %398 = vmatprep.subr.bf16.mxu0 0
    %399 = vmatpush1.bf16.msra.mxu0 %v375
    %400 = vmatprep.subr.bf16.mxu0 0
    %401 = vmatpush1.bf16.msra.mxu0 0
    %402 = vmatprep.subr.bf16.mxu0 0
    %403 = vmatpush1.bf16.msra.mxu0 0
    %404 = vmatprep.subr.bf16.mxu0 0
    %405 = vmatpush1.bf16.msra.mxu0 0
    %406 = vmatprep.subr.bf16.mxu0 0
    %407 = vmatpush1.bf16.msra.mxu0 0
    %408 = vmatprep.subr.bf16.mxu0 0
    %409 = vmatpush1.bf16.msra.mxu0 0
    %410 = vmatprep.subr.bf16.mxu0 0
    %411 = vmatpush1.bf16.msra.mxu0 0
    %412 = vmatprep.subr.bf16.mxu0 0
    %413 = vmatpush1.bf16.msra.mxu0 0
    %414 = vmatprep.subr.bf16.mxu0 0
    %415 = vmatpush1.bf16.msra.mxu0 0
    %416 = vmatprep.mubr.bf16.mxu0 0
    %417 = vmatmul.mubr.bf16.gmra.mrb[0].mxu0 %v312
    %v418 = vpop.f32.mrb[0].mxu0
    %v419 = vadd.f32 %v334, %v418
    %v420 = vpop.f32.mrb[0].mxu0
    %v421 = vpop.f32.mrb[0].mxu0
    %v422 = vpop.f32.mrb[0].mxu0
    %423 = vdwg.mxu0
    %v424 = vtanh.pop %v419
    %v425 = vpack.c.bf16 %v424, %v424
    %426 = vst [vmem:[%s9] sm:$0xf] %v425
    // Predicated region
    $region50: #{actor_forward.1} parent=1 // pred_check
      _
    $region51: #{actor_forward.1} parent=1 // pred_check_branch
      %428 = sbr.rel (0) target = $region53
    $region52: #{actor_forward.1} parent=1 // pred_region
      _
    $region53: #{actor_forward.1} parent=1 // pred_fallthru
      _
    // Predicated region
    $region54: #{actor_forward.1} parent=1 // pred_check
      _
    $region55: #{actor_forward.1} parent=1 // pred_check_branch
      %430 = sbr.rel (0) target = $region57
    $region56: #{actor_forward.1} parent=1 // pred_region
      _
    $region57: #{actor_forward.1} parent=1 // pred_fallthru
      _
    %431 = vsyncpa [#allocation3], 1
    %432 = vsyncpa [#allocation5], 1

</llo_original>
